<compile_context>
chip_gen: v7x
topology: tpu7x:2x2x1
jax: 0.10.0
libtpu: 0.0.40
codegen_flags: <defaults>
</compile_context>

<pallas_src>
import functools
import math

import jax
import jax.numpy as jnp
from jax.experimental import pallas as pl
from jax.experimental.pallas import tpu as pltpu


def _drop_path_kernel(scale_ref, x_ref, o_ref, *, tr, pack, sliced, mul_dtype):
    # scale_ref: per-row scale (f32).  Either the whole padded (rows, 1)
    # array (resident, sliced per tile) or a (tr, 1) per-tile block.
    # x_ref / o_ref: (tr, lanes) activation tile.
    if sliced:
        r0 = pl.multiple_of(pl.program_id(0) * tr, pack)
        s = scale_ref[pl.ds(r0, tr), :]
    else:
        s = scale_ref[...]
    # Single broadcast multiply + store per vreg (keeps the vst slot unbound).
    o_ref[...] = (x_ref[...] * s.astype(mul_dtype)).astype(o_ref.dtype)


def _cdiv(a: int, b: int) -> int:
    return -(-a // b)


def _round_up(a: int, m: int) -> int:
    return _cdiv(a, m) * m


def _sublane_pack(dtype) -> int:
    # f32 -> 8, bf16/f16 -> 16, int8/fp8 -> 32 (vreg sublane packing).
    return max(8, 32 // jnp.dtype(dtype).itemsize)


def _choose_lanes(feat: int, max_lanes: int = 2048) -> int:
    """Largest 128-multiple divisor of `feat` (capped), else full extent."""
    if feat % 128 != 0:
        # Fallback: last block dim must then equal the full array dim.
        # Correct but lane-masked stores; 128-aligned features preferred.
        return feat
    best = 128
    cand = 256
    while cand <= min(feat, max_lanes):
        if feat % cand == 0:
            best = cand
        cand += 128
    return best


def _arch_config():
    """Generation-aware tile size / VMEM limit / core-count hints."""
    try:
        kind = jax.devices()[0].device_kind.lower()
    except Exception:
        kind = ""
    if "v7" in kind:
        # 64 MiB physical VMEM, 2 TensorCores: 8 MiB tiles (4x = 32 MiB) fits
        # comfortably under a 40 MiB scoped limit; never approach 64 MiB.
        return dict(tile_bytes=8 << 20, vmem_limit=40 << 20,
                    two_cores=True, legacy_vpu=False)
    if "v6" in kind:
        # 128 MiB physical VMEM, elementwise roofline plateaus ~4-8 MiB tiles.
        return dict(tile_bytes=8 << 20, vmem_limit=48 << 20,
                    two_cores=False, legacy_vpu=False)
    # v5e / older / unknown: conservative (lifts v5e's 16 MiB scoped default).
    return dict(tile_bytes=4 << 20, vmem_limit=32 << 20,
                two_cores=False, legacy_vpu=True)


def drop_path_pallas(x, drop_prob: float = 0.0, training: bool = False, *,
                     key=None, donate: bool = False):
    """DropPath (stochastic depth) forward pass."""
    if drop_prob == 0.0 or not training:
        return x
    if key is None:
        raise ValueError(
            "drop_path_pallas needs a PRNG key when training with drop_prob > 0")
    if x.size == 0:
        return x
    if float(drop_prob) >= 1.0:
        # Every path dropped.  (The naive PyTorch formula divides by zero and
        # returns NaNs here; zeros are the intended semantics.)
        return jnp.zeros_like(x)

    keep_prob = 1.0 - float(drop_prob)
    B = x.shape[0]
    feat = int(math.prod(x.shape[1:]))

    # Per-sample binary keep mask.  RNG / floor / divide are done in f32 so
    # low-precision activations do not bias the effective drop rate.
    u = jax.random.uniform(key, (B,), dtype=jnp.float32)
    mask = jnp.floor(jnp.float32(keep_prob) + u)          # 0.0 or 1.0
    scale = mask / jnp.float32(keep_prob)                 # (B,) f32

    cfg = _arch_config()
    itemsize = int(jnp.dtype(x.dtype).itemsize)
    pack = _sublane_pack(x.dtype)

    # ---- lane-dense 2-D layout: (rows, lanes) ------------------------------
    lanes = _choose_lanes(feat)
    rows_per_sample = feat // lanes
    rows = B * rows_per_sample
    x2 = x.reshape(rows, lanes)

    # ---- tile sizing (architecture aware, VMEM-budget clamped) -------------
    tr = (cfg["tile_bytes"] // (lanes * itemsize)) // pack * pack
    # in+out double-buffering ~= 4x tile; keep it within 80% of the limit even
    # in the misaligned-lanes fallback where `lanes` can be arbitrarily large.
    budget_per_buf = int(0.8 * cfg["vmem_limit"]) // 4
    tr_max = (budget_per_buf // (lanes * itemsize)) // pack * pack
    tr = max(pack, min(tr, tr_max))
    tr = min(tr, rows)                  # full row extent is always legal

    # v7x: ensure both TensorCores get work (>=2 steps, prefer an even count).
    if cfg["two_cores"] and rows > pack:
        steps = _cdiv(rows, tr)
        if steps == 1:
            half = _round_up(_cdiv(rows, 2), pack)
            if half < rows:
                tr = half
        elif steps % 2 == 1:
            cand = _round_up(_cdiv(rows, steps + 1), pack)
            if pack <= cand < rows and _cdiv(rows, cand) % 2 == 0:
                tr = cand
    steps = _cdiv(rows, tr)
    rows_padded = steps * tr

    # Per-row f32 scale, padded to a whole number of row tiles so in-kernel
    # slicing never goes out of bounds on the last (partial) activation block.
    scale_rows = jnp.repeat(scale, rows_per_sample)
    if rows_padded > rows:
        scale_rows = jnp.pad(scale_rows, (0, rows_padded - rows))
    scale_rows = scale_rows.reshape(rows_padded, 1)

    # Keep the scale VMEM-resident (fetched once, constant index_map) when it
    # is cheap; otherwise stream per-tile blocks alongside the activations.
    resident_bytes = _cdiv(rows_padded, 8) * 4096          # (rows,1) f32 vreg footprint
    resident_scale = resident_bytes <= 2 * 1024 * 1024
    if resident_scale:
        scale_spec = pl.BlockSpec((rows_padded, 1), lambda r: (0, 0))
        scale_buf_bytes = 2 * resident_bytes                # worst case 2 buffers
    else:
        scale_spec = pl.BlockSpec((tr, 1), lambda r: (r, 0))
        scale_buf_bytes = 2 * _cdiv(tr, 8) * 4096
    sliced = resident_scale and steps > 1

    # Final VMEM limit: architecture default, raised if a pathological shape
    # (huge misaligned feature dim at minimum tr) needs more.
    need = 4 * tr * lanes * itemsize + scale_buf_bytes + (2 << 20)
    vmem_limit = max(cfg["vmem_limit"], need)

    # Multiply in the native packed dtype on v6e/v7x; keep f32 on v5e.
    mul_dtype = x.dtype if (not cfg["legacy_vpu"] and x.dtype != jnp.float32) \
        else jnp.float32

    kernel = functools.partial(_drop_path_kernel, tr=tr, pack=pack,
                               sliced=sliced, mul_dtype=mul_dtype)

    out2 = pl.pallas_call(
        kernel,
        out_shape=jax.ShapeDtypeStruct((rows, lanes), x.dtype),
        grid=(steps,),
        in_specs=[
            scale_spec,                                     # per-row scale
            pl.BlockSpec((tr, lanes), lambda r: (r, 0)),    # activations
        ],
        out_specs=pl.BlockSpec((tr, lanes), lambda r: (r, 0)),
        input_output_aliases=({1: 0} if donate else {}),
        compiler_params=pltpu.CompilerParams(
            dimension_semantics=("parallel",),
            vmem_limit_bytes=int(vmem_limit),
        ),
    )(scale_rows, x2)
    return out2.reshape(x.shape)


class DropPath:
    """Drop paths (Stochastic Depth) per sample (main path of residual blocks)."""

    def __init__(self, drop_prob=None):
        self.drop_prob = drop_prob if drop_prob is not None else 0.0
        self.training = True  # mirror nn.Module default training mode

    def __call__(self, x, *, key=None):
        return drop_path_pallas(x, self.drop_prob, self.training, key=key)


if __name__ == "__main__":
    key = jax.random.PRNGKey(0)
    kx, kmask = jax.random.split(key)

    B, N, D = 2, 8, 32
    x = jax.random.normal(kx, (B, N, D), dtype=jnp.float32)

    module = DropPath(drop_prob=0.25)
    module.training = True
    out = jax.block_until_ready(module(x, key=kmask))

    # Pure-JAX reference (torch formula): x / keep_prob * mask, mask in f32.
    keep_prob = 1.0 - module.drop_prob
    u = jax.random.uniform(kmask, (B,), dtype=jnp.float32)
    mask = jnp.floor(jnp.float32(keep_prob) + u)
    ref = (x / jnp.float32(keep_prob)) * mask[:, None, None]
    assert out.shape == x.shape and out.dtype == x.dtype
    assert jnp.allclose(out, ref.astype(x.dtype), rtol=1e-5, atol=1e-6)

    # Eval mode / drop_prob=0 path: identity.
    module.training = False
    out_eval = jax.block_until_ready(module(x, key=kmask))
    assert jnp.array_equal(out_eval, x)

    # drop_prob >= 1.0 guard: all paths dropped -> zeros (no NaNs).
    module_full = DropPath(drop_prob=1.0)
    out_full = jax.block_until_ready(module_full(x, key=kmask))
    assert jnp.array_equal(out_full, jnp.zeros_like(x))

    print("KERNEL_OK")
</pallas_src>

<mosaic_0001>
module attributes {stable_mosaic.version = 11 : i64} {
  func.func @_drop_path_kernel(%arg0: i32, %arg1: memref<2x1xf32, #tpu.memory_space<vmem>>, %arg2: memref<2x256xf32, #tpu.memory_space<vmem>>, %arg3: memref<2x256xf32, #tpu.memory_space<vmem>>) attributes {dimension_semantics = [#tpu.dimension_semantics<parallel>], iteration_bounds = array<i64: 1>, scalar_prefetch = 0 : i64, scratch_operands = 0 : i64, tpu.core_type = #tpu.core_type<tc>, window_params = [{pipeline_mode = #tpu.pipeline_mode<synchronous>, transform_indices = @transform_0, window_bounds = array<i64: 2, 1>}, {transform_indices = @transform_1, window_bounds = array<i64: 2, 256>}, {transform_indices = @transform_2, window_bounds = array<i64: 2, 256>}]} {
    %c0 = arith.constant 0 : index
    %c0_0 = arith.constant 0 : index
    %0 = vector.load %arg1[%c0, %c0_0] : memref<2x1xf32, #tpu.memory_space<vmem>>, vector<2x1xf32>
    %c0_1 = arith.constant 0 : index
    %c0_2 = arith.constant 0 : index
    %1 = vector.load %arg2[%c0_1, %c0_2] : memref<2x256xf32, #tpu.memory_space<vmem>>, vector<2x256xf32>
    %2 = vector.broadcast %0 : vector<2x1xf32> to vector<2x256xf32>
    %3 = arith.mulf %1, %2 : vector<2x256xf32>
    %c0_3 = arith.constant 0 : index
    %c0_4 = arith.constant 0 : index
    %4 = vector.load %arg3[%c0_3, %c0_4] : memref<2x256xf32, #tpu.memory_space<vmem>>, vector<2x256xf32>
    tpu.vector_store %arg3[%c0_3, %c0_4], %3 {strides = array<i32>} : memref<2x256xf32, #tpu.memory_space<vmem>>, vector<2x256xf32>,
    return
  }
  func.func @transform_0(%arg0: i32) -> (i32, i32) {
    %c0_i32 = arith.constant 0 : i32
    %c0_i32_0 = arith.constant 0 : i32
    %c0_i32_1 = arith.constant 0 : i32
    return %c0_i32, %c0_i32_0 : i32, i32
  }
  func.func @transform_1(%arg0: i32) -> (i32, i32) {
    %c0_i32 = arith.constant 0 : i32
    %c0_i32_0 = arith.constant 0 : i32
    return %arg0, %c0_i32 : i32, i32
  }
  func.func @transform_2(%arg0: i32) -> (i32, i32) {
    %c0_i32 = arith.constant 0 : i32
    %c0_i32_0 = arith.constant 0 : i32
    return %arg0, %c0_i32 : i32, i32
  }
}

</mosaic_0001>

<llo_original>
// kernel: tpu_custom_call.1
$region0: #{tpu_custom_call.1}
  #allocation0 [shape = 'u32[]', space=smem, size = 0x4, offset = 0x4, fixed_abs, tag = 'smem constant byte address 0x4 - core index']
  #allocation1 [shape = 'u32[144,128]{1,0:T(1,128)}', space=vmem, size = 0x12000, scoped, tag = 'internal scratch']
  %s0 = inlined_call_operand.vmem [shape: f32[2,1], index: 0, kind: input, shape index: {}]
  %s1 = inlined_call_operand.vmem [shape: f32[2,256], index: 1, kind: input, shape index: {}]
  %s2 = inlined_call_operand.hbm [shape: f32[2,256], index: 2, kind: output, shape index: {}]
  %s3 = sld [smem:[#allocation0]]
  $region18: #{tpu_custom_call.1} parent=0
    _
  %s5 = ssub.s32 1, %s3
  %s6 = scalar_select 0, %s5, %s3
  $region1: #{tpu_custom_call.1} parent=0
    #allocation2 [shape = 'u8[2048]{0}', space=vmem, size = 0x800, scoped, tag = 'output window, operand 0, single buffered']
    #allocation3 [shape = 's32[1]{0}', space=sflag, size = 0x4, scoped, tag = 'scoped memory for tpu_custom_call.1']
    %7 = vsyncpa [#allocation3], 0
    // Predicated region
    $region2: #{tpu_custom_call.1} parent=1 // pred_check
      _
    $region3: #{tpu_custom_call.1} parent=1 // pred_check_branch
      %9 = sbr.rel (0) target = $region5
    $region4: #{tpu_custom_call.1} parent=1 // pred_region
      _
    $region5: #{tpu_custom_call.1} parent=1 // pred_fallthru
      _
    // Predicated region
    $region6: #{tpu_custom_call.1} parent=1 // pred_check
      _
    $region7: #{tpu_custom_call.1} parent=1 // pred_check_branch
      %11 = sbr.rel (0) target = $region9
    $region8: #{tpu_custom_call.1} parent=1 // pred_region
      _
    $region9: #{tpu_custom_call.1} parent=1 // pred_fallthru
      _
    %v12 = vld [vmem:[%s0] sm:$0x3]
    %v13 = vld [vmem:[%s1] sm:$0xf]
    %15 = vset.pattern.permute.xlu0 0
    %16 = vperm.xlu0 %15, %v12
    %v17 = vpop.permute.xlu0 %16
    %v19 = vunpack.c.l.s4 269488144
    %v20 = vunpack.c.0.s8 %v19
    %v21 = vlaneseq
    %v22 = vshrl.u32 %v21, 7
    %v23 = vsub.s32 %v20, %v22
    %v24 = vrot.slane %v17, %v23
    %v26 = vmul.f32 %v13, %v24
    %27 = vst [vmem:[#allocation2] sm:$0xf] %v26
    // Predicated region
    $region10: #{tpu_custom_call.1} parent=1 // pred_check
      _
    $region11: #{tpu_custom_call.1} parent=1 // pred_check_branch
      %29 = sbr.rel (0) target = $region13
    $region12: #{tpu_custom_call.1} parent=1 // pred_region
      %s31 = ssub.s32 64, 64
      %32 = vsyncadd [#allocation3], %s31
      %s34 = sshll.u32 [#allocation2], 4
      %s35 = int_to_ptr.vmem [resolvable:$true] %s34
      %37 = dma.vmem_to_hbm [thread:$0]  %s35, 64, %s2, [#allocation3]
    $region13: #{tpu_custom_call.1} parent=1 // pred_fallthru
      _
    // Predicated region
    $region14: #{tpu_custom_call.1} parent=1 // pred_check
      _
    $region15: #{tpu_custom_call.1} parent=1 // pred_check_branch
      %39 = sbr.rel (0) target = $region17
    $region16: #{tpu_custom_call.1} parent=1 // pred_region
      %40 = dma.done [#allocation3], 64
    $region17: #{tpu_custom_call.1} parent=1 // pred_fallthru
      _
    %41 = vsyncpa [#allocation3], 1

</llo_original>
